<compile_context>
chip_gen: v6e
topology: v6e:2x2x1
jax: 0.10.0
libtpu: 0.0.40
codegen_flags: <defaults>
</compile_context>

<pallas_src>
import jax
import jax.numpy as jnp
from jax.experimental import pallas as pl
from jax.experimental.pallas import tpu as pltpu


# ----------------------------------------------------------------------------
# Kernels: one MXU matmul per grid point.
# ----------------------------------------------------------------------------
def _mm2d_kernel(x_ref, w_ref, o_ref):
    # x_ref: (tm, K)   w_ref: (K, O)   o_ref: (tm, O)
    o_ref[...] = jnp.dot(
        x_ref[...], w_ref[...], preferred_element_type=jnp.float32
    ).astype(o_ref.dtype)


def _mm4d_kernel(x_ref, w_ref, o_ref):
    # x_ref: (1, 1, tm, K)   w_ref: (1, K, O)   o_ref: (1, 1, tm, O)
    o_ref[0, 0] = jnp.dot(
        x_ref[0, 0], w_ref[0], preferred_element_type=jnp.float32
    ).astype(o_ref.dtype)


# ----------------------------------------------------------------------------
# Tiling helpers
# ----------------------------------------------------------------------------
_TM_CAP = 1024                     # diminishing returns past ~512-1024 rows
_TILE_BUDGET = 12 * 1024 * 1024    # double-buffered x+out tile budget (bytes)
_VMEM_LIMIT = 32 * 1024 * 1024     # safe on v5e (128 MiB), v6e (128), v7x (64)


def _itemsize(dtype):
    return jnp.dtype(dtype).itemsize


def _row_tile(rows, k_in, k_out, dtype):
    """Sublane-aligned row tile from a VMEM budget; ragged tail is masked."""
    isz = _itemsize(dtype)
    align = {4: 8, 2: 16, 1: 32}.get(isz, 8)
    if rows <= align:
        return rows                        # full-extent block (always legal)
    per_row = 2 * (k_in + k_out) * isz     # double-buffered input + output tile
    tm = min(_TM_CAP, max(align, _TILE_BUDGET // per_row), rows)
    tm = max(align, (tm // align) * align)
    # v7x has 2 TensorCores: keep >= 2 parallel grid points when possible.
    if pl.cdiv(rows, tm) < 2:
        tm = max(align, pl.cdiv(pl.cdiv(rows, 2), align) * align)
    return tm


def _pack_factor(dim_out, rows, k_in):
    """Rows packed per 128-lane output row (lane-dense stores); 1 = no packing."""
    if dim_out >= 128 or 128 % dim_out != 0:
        return 1
    r = 128 // dim_out
    while r > 1 and (rows % r != 0 or r * k_in > 4096):
        r //= 2
    return r


# ----------------------------------------------------------------------------
# heads == 1 : shared weight, (b*h*w) rows collapsed to one axis
# ----------------------------------------------------------------------------
def _proj_single(x2, wt):
    """x2: (rows, K) contiguous rows; wt: (K, o) shared weight."""
    rows, K = x2.shape
    o = wt.shape[-1]

    # Lane-dense output: pack r consecutive rows into one 128-lane output row by
    # matmul'ing against a block-diagonal weight kron(I_r, W).  The input and
    # output reshapes are contiguous zero-copy views; the MXU has ample slack.
    r = _pack_factor(o, rows, K)
    if r > 1:
        x2 = x2.reshape(rows // r, r * K)
        wt = jnp.kron(jnp.eye(r, dtype=wt.dtype), wt)
        rows, K, o = rows // r, r * K, r * o

    tm = _row_tile(rows, K, o, x2.dtype)
    isz = _itemsize(x2.dtype)
    cost = pl.CostEstimate(
        flops=2 * rows * K * o,
        bytes_accessed=(rows * (K + o) + K * o) * isz,
        transcendentals=0,
    )
    return pl.pallas_call(
        _mm2d_kernel,
        out_shape=jax.ShapeDtypeStruct((rows, o), x2.dtype),
        grid_spec=pltpu.PrefetchScalarGridSpec(
            num_scalar_prefetch=0,
            grid=(pl.cdiv(rows, tm),),
            in_specs=[
                pl.BlockSpec((tm, K), lambda mi: (mi, 0)),
                pl.BlockSpec((K, o), lambda mi: (0, 0)),  # weight stays resident
            ],
            out_specs=pl.BlockSpec((tm, o), lambda mi: (mi, 0)),
        ),
        compiler_params=pltpu.CompilerParams(
            dimension_semantics=("parallel",),
            vmem_limit_bytes=_VMEM_LIMIT,
        ),
        cost_estimate=cost,
    )(x2, wt)


# ----------------------------------------------------------------------------
# heads > 1 : per-head weight, grid (b, h, row tiles of w)
# ----------------------------------------------------------------------------
def _proj_grouped(x, wk):
    """x: (b, h, w, K); wk: (h, K, o) per-head (window-replicated) weight."""
    b, h, w, K = x.shape
    o = wk.shape[-1]

    r = _pack_factor(o, w, K)
    if r > 1:
        x = x.reshape(b, h, w // r, r * K)
        eye = jnp.eye(r, dtype=wk.dtype)
        wk = jax.vmap(lambda a: jnp.kron(eye, a))(wk)
        w, K, o = w // r, r * K, r * o

    tm = _row_tile(w, K, o, x.dtype)
    isz = _itemsize(x.dtype)
    cost = pl.CostEstimate(
        flops=2 * b * h * w * K * o,
        bytes_accessed=(b * h * w * (K + o) + h * K * o) * isz,
        transcendentals=0,
    )
    return pl.pallas_call(
        _mm4d_kernel,
        out_shape=jax.ShapeDtypeStruct((b, h, w, o), x.dtype),
        grid_spec=pltpu.PrefetchScalarGridSpec(
            num_scalar_prefetch=0,
            grid=(b, h, pl.cdiv(w, tm)),
            in_specs=[
                pl.BlockSpec((1, 1, tm, K), lambda bi, hi, mi: (bi, hi, mi, 0)),
                pl.BlockSpec((1, K, o), lambda bi, hi, mi: (hi, 0, 0)),
            ],
            out_specs=pl.BlockSpec((1, 1, tm, o), lambda bi, hi, mi: (bi, hi, mi, 0)),
        ),
        compiler_params=pltpu.CompilerParams(
            dimension_semantics=("parallel", "parallel", "parallel"),
            vmem_limit_bytes=_VMEM_LIMIT,
        ),
        cost_estimate=cost,
    )(x, wk)


# ----------------------------------------------------------------------------
# Module-equivalent wrapper
# ----------------------------------------------------------------------------
class SingleProjection:
    def __init__(self, dim_head, compress_window_size, heads=1, key=None):
        key = jax.random.PRNGKey(0) if key is None else key
        dim = dim_head * compress_window_size
        self.heads = heads
        self.is_grouped = heads > 1
        self.dim_head = dim_head
        self.window = compress_window_size

        if not self.is_grouped:
            # torch nn.Linear layout (out_features, in_features); kept for reference
            scale = 1.0 / jnp.sqrt(dim)
            self.weight = jax.random.normal(key, (dim_head, dim), jnp.float32) * scale
            self.wt = jnp.transpose(self.weight)            # (K, o), MXU layout
        else:
            # EinMix weight 'h i o' with i = dim_head, o = dim_head; the window
            # axis n is summed.  Replicating the (i, o) weight over n makes the
            # whole (n, i) contraction a single flat K = n*i MXU matmul.
            scale = 1.0 / jnp.sqrt(dim_head)
            self.weight = (
                jax.random.normal(key, (heads, dim_head, dim_head), jnp.float32) * scale
            )
            self.wk = jnp.tile(self.weight, (1, compress_window_size, 1))  # (h, n*i, o)

    def __call__(self, kv):
        b, h, w, n, d = kv.shape
        K = n * d
        if not self.is_grouped:
            # 'b h w n d -> (b h w) (n d)': contiguous, zero-copy
            x2 = kv.reshape(b * h * w, K)
            out = _proj_single(x2, self.wt.astype(kv.dtype))
            return out.reshape(b, h, w, self.dim_head)
        x = kv.reshape(b, h, w, K)          # contiguous trailing-dim merge
        out = _proj_grouped(x, self.wk.astype(kv.dtype))
        return out.reshape(b, h, w, self.dim_head)


if __name__ == "__main__":
    key = jax.random.PRNGKey(0)
    k_kv1, k_kv2, k_kv3, k_w1, k_w2, k_w3 = jax.random.split(key, 6)

    # Round test data to the bf16 grid so the MXU's default-precision f32 path
    # (bf16 passes) is lossless -> tight 1e-5 tolerances are meaningful.
    def q(x):
        return x.astype(jnp.bfloat16).astype(jnp.float32)

    # ---- heads == 1 (Rearrange + Linear path), lane-packed output ----
    b, heads, w, n, d = 2, 1, 8, 4, 32            # K = n*d = 128
    proj = SingleProjection(dim_head=d, compress_window_size=n, heads=heads, key=k_w1)
    proj.weight = q(proj.weight)
    proj.wt = q(proj.wt)
    kv = q(jax.random.normal(k_kv1, (b, heads, w, n, d), jnp.float32))

    out = jax.block_until_ready(proj(kv))
    ref = jnp.einsum("bhwk,ok->bhwo", kv.reshape(b, heads, w, n * d), proj.weight)
    assert out.shape == (b, heads, w, d)
    assert jnp.allclose(out, ref, atol=1e-5, rtol=1e-5)

    # ---- heads > 1 (EinMix path, sum over window axis) ----
    heads2 = 2
    proj_g = SingleProjection(dim_head=d, compress_window_size=n, heads=heads2, key=k_w2)
    proj_g.weight = q(proj_g.weight)
    proj_g.wk = q(proj_g.wk)
    kv_g = q(jax.random.normal(k_kv2, (b, heads2, w, n, d), jnp.float32))

    out_g = jax.block_until_ready(proj_g(kv_g))
    ref_g = jnp.einsum("bhwni,hio->bhwo", kv_g, proj_g.weight)
    assert out_g.shape == (b, heads2, w, d)
    assert jnp.allclose(out_g, ref_g, atol=1e-5, rtol=1e-5)

    # ---- heads == 1, unaligned row count (masked ragged tail, no packing) ----
    b3, w3 = 1, 23
    proj3 = SingleProjection(dim_head=d, compress_window_size=n, heads=1, key=k_w3)
    proj3.weight = q(proj3.weight)
    proj3.wt = q(proj3.wt)
    kv3 = q(jax.random.normal(k_kv3, (b3, 1, w3, n, d), jnp.float32))
    out3 = jax.block_until_ready(proj3(kv3))
    ref3 = jnp.einsum("bhwk,ok->bhwo", kv3.reshape(b3, 1, w3, n * d), proj3.weight)
    assert out3.shape == (b3, 1, w3, d)
    assert jnp.allclose(out3, ref3, atol=1e-5, rtol=1e-5)

    # ---- bf16 data path (HBM-bound kernel: halved read bytes) ----
    out_bf = jax.block_until_ready(proj(kv.astype(jnp.bfloat16)))
    assert out_bf.dtype == jnp.bfloat16
    assert jnp.allclose(out_bf.astype(jnp.float32), ref, atol=3e-2, rtol=3e-2)

    print("KERNEL_OK")
</pallas_src>

<mosaic_0001>
module attributes {stable_mosaic.version = 11 : i64} {
  func.func @_mm2d_kernel(%arg0: i32, %arg1: memref<4x512xf32, #tpu.memory_space<vmem>>, %arg2: memref<512x128xf32, #tpu.memory_space<vmem>>, %arg3: memref<4x128xf32, #tpu.memory_space<vmem>>) attributes {dimension_semantics = [#tpu.dimension_semantics<parallel>], iteration_bounds = array<i64: 1>, scalar_prefetch = 0 : i64, scratch_operands = 0 : i64, tpu.core_type = #tpu.core_type<tc>, window_params = [{transform_indices = @transform_0, window_bounds = array<i64: 4, 512>}, {pipeline_mode = #tpu.pipeline_mode<synchronous>, transform_indices = @transform_1, window_bounds = array<i64: 512, 128>}, {transform_indices = @transform_2, window_bounds = array<i64: 4, 128>}]} {
    %c0 = arith.constant 0 : index
    %c0_0 = arith.constant 0 : index
    %0 = vector.load %arg1[%c0, %c0_0] : memref<4x512xf32, #tpu.memory_space<vmem>>, vector<4x512xf32>
    %c0_1 = arith.constant 0 : index
    %c0_2 = arith.constant 0 : index
    %1 = vector.load %arg2[%c0_1, %c0_2] : memref<512x128xf32, #tpu.memory_space<vmem>>, vector<512x128xf32>
    %cst = arith.constant dense<0.000000e+00> : vector<4x128xf32>
    %2 = tpu.matmul %0, %1, %cst {dimension_numbers = #tpu.dot_dimension_numbers<[1], [0], [0], [1], [0, 0, 1, 1], [], []>} : vector<4x512xf32>, vector<512x128xf32>, vector<4x128xf32> -> vector<4x128xf32>
    %c0_3 = arith.constant 0 : index
    %c0_4 = arith.constant 0 : index
    %3 = vector.load %arg3[%c0_3, %c0_4] : memref<4x128xf32, #tpu.memory_space<vmem>>, vector<4x128xf32>
    tpu.vector_store %arg3[%c0_3, %c0_4], %2 {strides = array<i32>} : memref<4x128xf32, #tpu.memory_space<vmem>>, vector<4x128xf32>,
    return
  }
  func.func @transform_0(%arg0: i32) -> (i32, i32) {
    %c0_i32 = arith.constant 0 : i32
    %c0_i32_0 = arith.constant 0 : i32
    return %arg0, %c0_i32 : i32, i32
  }
  func.func @transform_1(%arg0: i32) -> (i32, i32) {
    %c0_i32 = arith.constant 0 : i32
    %c0_i32_0 = arith.constant 0 : i32
    %c0_i32_1 = arith.constant 0 : i32
    return %c0_i32, %c0_i32_0 : i32, i32
  }
  func.func @transform_2(%arg0: i32) -> (i32, i32) {
    %c0_i32 = arith.constant 0 : i32
    %c0_i32_0 = arith.constant 0 : i32
    return %arg0, %c0_i32 : i32, i32
  }
}

</mosaic_0001>

<llo_original>
// kernel: tpu_custom_call.1
$region0: #{tpu_custom_call.1}
  #allocation0 [shape = 'u32[]', space=smem, size = 0x4, offset = 0x4, fixed_abs, tag = 'smem constant byte address 0x4 - core index']
  #allocation1 [shape = 'u32[144,128]{1,0:T(1,128)}', space=vmem, size = 0x12000, scoped, tag = 'internal scratch']
  %s0 = inlined_call_operand.hbm [shape: f32[4,512], index: 0, kind: input, shape index: {}]
  %s1 = inlined_call_operand.hbm [shape: f32[512,128], index: 1, kind: input, shape index: {}]
  %s2 = inlined_call_operand.hbm [shape: f32[4,128], index: 2, kind: output, shape index: {}]
  %s3 = sld [smem:[#allocation0]]
  $region26: #{tpu_custom_call.1} parent=0
    _
  %s5 = ssub.s32 1, %s3
  %s6 = scalar_select 0, %s5, %s3
  $region1: #{tpu_custom_call.1} parent=0
    #allocation2 [shape = 'u8[8192]{0}', space=vmem, size = 0x2000, scoped, tag = 'input window, operand 0, single buffered']
    #allocation3 [shape = 's32[1]{0}', space=sflag, size = 0x4, scoped, tag = 'scoped memory for tpu_custom_call.1']
    #allocation4 [shape = 's32[1]{0}', space=sflag, size = 0x4, scoped, tag = 'scoped memory for tpu_custom_call.1']
    #allocation5 [shape = 'u8[262144]{0}', space=vmem, size = 0x40000, scoped, tag = 'input window, operand 1, single buffered']
    #allocation6 [shape = 's32[1]{0}', space=sflag, size = 0x4, scoped, tag = 'scoped memory for tpu_custom_call.1']
    #allocation7 [shape = 'u8[2048]{0}', space=vmem, size = 0x800, scoped, tag = 'output window, operand 0, single buffered']
    %7 = vsyncpa [#allocation3], 0
    %8 = vsyncpa [#allocation6], 0
    %9 = vsyncpa [#allocation4], 0
    // Predicated region
    $region2: #{tpu_custom_call.1} parent=1 // pred_check
      _
    $region3: #{tpu_custom_call.1} parent=1 // pred_check_branch
      %11 = sbr.rel (0) target = $region5
    $region4: #{tpu_custom_call.1} parent=1 // pred_region
      %s13 = ssub.s32 256, 256
      %14 = vsyncadd [#allocation3], %s13
      %s16 = sshll.u32 [#allocation2], 4
      %s17 = int_to_ptr.vmem [resolvable:$true] %s16
      %19 = dma.hbm_to_vmem [thread:$0]  %s0, 256, %s17, [#allocation3]
    $region5: #{tpu_custom_call.1} parent=1 // pred_fallthru
      _
    // Predicated region
    $region6: #{tpu_custom_call.1} parent=1 // pred_check
      _
    $region7: #{tpu_custom_call.1} parent=1 // pred_check_branch
      %21 = sbr.rel (0) target = $region9
    $region8: #{tpu_custom_call.1} parent=1 // pred_region
      %s23 = ssub.s32 8192, 8192
      %24 = vsyncadd [#allocation6], %s23
      %s25 = sshll.u32 [#allocation5], 4
      %s26 = int_to_ptr.vmem [resolvable:$true] %s25
      %31 = dma.hbm_to_vmem [thread:$0]  %s1, 8192, %s26, [#allocation6], 128, 128, 8
    $region9: #{tpu_custom_call.1} parent=1 // pred_fallthru
      _
    // Predicated region
    $region10: #{tpu_custom_call.1} parent=1 // pred_check
      _
    $region11: #{tpu_custom_call.1} parent=1 // pred_check_branch
      %33 = sbr.rel (0) target = $region13
    $region12: #{tpu_custom_call.1} parent=1 // pred_region
      %34 = dma.done [#allocation3], 256
    $region13: #{tpu_custom_call.1} parent=1 // pred_fallthru
      _
    // Predicated region
    $region14: #{tpu_custom_call.1} parent=1 // pred_check
      _
    $region15: #{tpu_custom_call.1} parent=1 // pred_check_branch
      %36 = sbr.rel (0) target = $region17
    $region16: #{tpu_custom_call.1} parent=1 // pred_region
      %37 = dma.done [#allocation6], 8192
    $region17: #{tpu_custom_call.1} parent=1 // pred_fallthru
      _
    %v38 = vld [vmem:[#allocation2] sm:$0xff]
    %v39 = vld [vmem:[#allocation2 + $0x8] sm:$0xff]
    %v40 = vld [vmem:[#allocation5] sm:$0xff]
    %v41 = vld [vmem:[#allocation5 + $0x8] sm:$0xff]
    %v42 = vld [vmem:[#allocation5 + $0x10] sm:$0xff]
    %v43 = vld [vmem:[#allocation5 + $0x18] sm:$0xff]
    %v44 = vld [vmem:[#allocation5 + $0x20] sm:$0xff]
    %v45 = vld [vmem:[#allocation5 + $0x28] sm:$0xff]
    %v46 = vld [vmem:[#allocation5 + $0x30] sm:$0xff]
    %v47 = vld [vmem:[#allocation5 + $0x38] sm:$0xff]
    %v48 = vld [vmem:[#allocation5 + $0x40] sm:$0xff]
    %v49 = vld [vmem:[#allocation5 + $0x48] sm:$0xff]
    %v50 = vld [vmem:[#allocation5 + $0x50] sm:$0xff]
    %v51 = vld [vmem:[#allocation5 + $0x58] sm:$0xff]
    %v52 = vld [vmem:[#allocation5 + $0x60] sm:$0xff]
    %v53 = vld [vmem:[#allocation5 + $0x68] sm:$0xff]
    %v54 = vld [vmem:[#allocation5 + $0x70] sm:$0xff]
    %v55 = vld [vmem:[#allocation5 + $0x78] sm:$0xff]
    %v56 = vld [vmem:[#allocation5 + $0x80] sm:$0xff]
    %v57 = vld [vmem:[#allocation5 + $0x88] sm:$0xff]
    %v58 = vld [vmem:[#allocation5 + $0x90] sm:$0xff]
    %v59 = vld [vmem:[#allocation5 + $0x98] sm:$0xff]
    %v60 = vld [vmem:[#allocation5 + $0xa0] sm:$0xff]
    %v61 = vld [vmem:[#allocation5 + $0xa8] sm:$0xff]
    %v62 = vld [vmem:[#allocation5 + $0xb0] sm:$0xff]
    %v63 = vld [vmem:[#allocation5 + $0xb8] sm:$0xff]
    %v64 = vld [vmem:[#allocation5 + $0xc0] sm:$0xff]
    %v65 = vld [vmem:[#allocation5 + $0xc8] sm:$0xff]
    %v66 = vld [vmem:[#allocation5 + $0xd0] sm:$0xff]
    %v67 = vld [vmem:[#allocation5 + $0xd8] sm:$0xff]
    %v68 = vld [vmem:[#allocation5 + $0xe0] sm:$0xff]
    %v69 = vld [vmem:[#allocation5 + $0xe8] sm:$0xff]
    %v70 = vld [vmem:[#allocation5 + $0xf0] sm:$0xff]
    %v71 = vld [vmem:[#allocation5 + $0xf8] sm:$0xff]
    %v72 = vld [vmem:[#allocation5 + $0x100] sm:$0xff]
    %v73 = vld [vmem:[#allocation5 + $0x108] sm:$0xff]
    %v74 = vld [vmem:[#allocation5 + $0x110] sm:$0xff]
    %v75 = vld [vmem:[#allocation5 + $0x118] sm:$0xff]
    %v76 = vld [vmem:[#allocation5 + $0x120] sm:$0xff]
    %v77 = vld [vmem:[#allocation5 + $0x128] sm:$0xff]
    %v78 = vld [vmem:[#allocation5 + $0x130] sm:$0xff]
    %v79 = vld [vmem:[#allocation5 + $0x138] sm:$0xff]
    %v80 = vld [vmem:[#allocation5 + $0x140] sm:$0xff]
    %v81 = vld [vmem:[#allocation5 + $0x148] sm:$0xff]
    %v82 = vld [vmem:[#allocation5 + $0x150] sm:$0xff]
    %v83 = vld [vmem:[#allocation5 + $0x158] sm:$0xff]
    %v84 = vld [vmem:[#allocation5 + $0x160] sm:$0xff]
    %v85 = vld [vmem:[#allocation5 + $0x168] sm:$0xff]
    %v86 = vld [vmem:[#allocation5 + $0x170] sm:$0xff]
    %v87 = vld [vmem:[#allocation5 + $0x178] sm:$0xff]
    %v88 = vld [vmem:[#allocation5 + $0x180] sm:$0xff]
    %v89 = vld [vmem:[#allocation5 + $0x188] sm:$0xff]
    %v90 = vld [vmem:[#allocation5 + $0x190] sm:$0xff]
    %v91 = vld [vmem:[#allocation5 + $0x198] sm:$0xff]
    %v92 = vld [vmem:[#allocation5 + $0x1a0] sm:$0xff]
    %v93 = vld [vmem:[#allocation5 + $0x1a8] sm:$0xff]
    %v94 = vld [vmem:[#allocation5 + $0x1b0] sm:$0xff]
    %v95 = vld [vmem:[#allocation5 + $0x1b8] sm:$0xff]
    %v96 = vld [vmem:[#allocation5 + $0x1c0] sm:$0xff]
    %v97 = vld [vmem:[#allocation5 + $0x1c8] sm:$0xff]
    %v98 = vld [vmem:[#allocation5 + $0x1d0] sm:$0xff]
    %v99 = vld [vmem:[#allocation5 + $0x1d8] sm:$0xff]
    %v100 = vld [vmem:[#allocation5 + $0x1e0] sm:$0xff]
    %v101 = vld [vmem:[#allocation5 + $0x1e8] sm:$0xff]
    %v102 = vld [vmem:[#allocation5 + $0x1f0] sm:$0xff]
    %v103 = vld [vmem:[#allocation5 + $0x1f8] sm:$0xff]
    %v106 = vcombine.high %v38, %v38
    %v107 = vcombine.high %v39, %v39
    %110 = vmatprep.subr.mxu0 0.0
    %111 = vmatpush1.msra.mxu0 %v55
    %112 = vmatprep.subr.mxu0 0.0
    %113 = vmatpush1.msra.mxu0 %v54
    %114 = vmatprep.subr.mxu0 0.0
    %115 = vmatpush1.msra.mxu0 %v53
    %116 = vmatprep.subr.mxu0 0.0
    %117 = vmatpush1.msra.mxu0 %v52
    %118 = vmatprep.subr.mxu0 0.0
    %119 = vmatpush1.msra.mxu0 %v51
    %120 = vmatprep.subr.mxu0 0.0
    %121 = vmatpush1.msra.mxu0 %v50
    %122 = vmatprep.subr.mxu0 0.0
    %123 = vmatpush1.msra.mxu0 %v49
    %124 = vmatprep.subr.mxu0 0.0
    %125 = vmatpush1.msra.mxu0 %v48
    %126 = vmatprep.subr.mxu0 0.0
    %127 = vmatpush1.msra.mxu0 %v47
    %128 = vmatprep.subr.mxu0 0.0
    %129 = vmatpush1.msra.mxu0 %v46
    %130 = vmatprep.subr.mxu0 0.0
    %131 = vmatpush1.msra.mxu0 %v45
    %132 = vmatprep.subr.mxu0 0.0
    %133 = vmatpush1.msra.mxu0 %v44
    %134 = vmatprep.subr.mxu0 0.0
    %135 = vmatpush1.msra.mxu0 %v43
    %136 = vmatprep.subr.mxu0 0.0
    %137 = vmatpush1.msra.mxu0 %v42
    %138 = vmatprep.subr.mxu0 0.0
    %139 = vmatpush1.msra.mxu0 %v41
    %140 = vmatprep.subr.mxu0 0.0
    %141 = vmatpush1.msra.mxu0 %v40
    %142 = vmatprep.subr.mxu0 0.0
    %143 = vmatpush2.msra.mxu0 %v71
    %144 = vmatprep.subr.mxu0 0.0
    %145 = vmatpush2.msra.mxu0 %v70
    %146 = vmatprep.subr.mxu0 0.0
    %147 = vmatpush2.msra.mxu0 %v69
    %148 = vmatprep.subr.mxu0 0.0
    %149 = vmatpush2.msra.mxu0 %v68
    %150 = vmatprep.subr.mxu0 0.0
    %151 = vmatpush2.msra.mxu0 %v67
    %152 = vmatprep.subr.mxu0 0.0
    %153 = vmatpush2.msra.mxu0 %v66
    %154 = vmatprep.subr.mxu0 0.0
    %155 = vmatpush2.msra.mxu0 %v65
    %156 = vmatprep.subr.mxu0 0.0
    %157 = vmatpush2.msra.mxu0 %v64
    %158 = vmatprep.subr.mxu0 0.0
    %159 = vmatpush2.msra.mxu0 %v63
    %160 = vmatprep.subr.mxu0 0.0
    %161 = vmatpush2.msra.mxu0 %v62
    %162 = vmatprep.subr.mxu0 0.0
    %163 = vmatpush2.msra.mxu0 %v61
    %164 = vmatprep.subr.mxu0 0.0
    %165 = vmatpush2.msra.mxu0 %v60
    %166 = vmatprep.subr.mxu0 0.0
    %167 = vmatpush2.msra.mxu0 %v59
    %168 = vmatprep.subr.mxu0 0.0
    %169 = vmatpush2.msra.mxu0 %v58
    %170 = vmatprep.subr.mxu0 0.0
    %171 = vmatpush2.msra.mxu0 %v57
    %172 = vmatprep.subr.mxu0 0.0
    %173 = vmatpush2.msra.mxu0 %v56
    %174 = vmatprep.mubr.f32.mxu0 %v106
    %175 = vmatmul.mubr.f32.gmra.mxu0 %v38
    %v176 = vpop.f32.mrf.mxu0
    %v177 = vadd.f32 0.0, %v176
    %v178 = vpop.f32.mrf.mxu0
    %179 = vdwg.mxu0
    %180 = vmatprep.subr.mxu0 0.0
    %181 = vmatpush1.msra.mxu0 %v87
    %182 = vmatprep.subr.mxu0 0.0
    %183 = vmatpush1.msra.mxu0 %v86
    %184 = vmatprep.subr.mxu0 0.0
    %185 = vmatpush1.msra.mxu0 %v85
    %186 = vmatprep.subr.mxu0 0.0
    %187 = vmatpush1.msra.mxu0 %v84
    %188 = vmatprep.subr.mxu0 0.0
    %189 = vmatpush1.msra.mxu0 %v83
    %190 = vmatprep.subr.mxu0 0.0
    %191 = vmatpush1.msra.mxu0 %v82
    %192 = vmatprep.subr.mxu0 0.0
    %193 = vmatpush1.msra.mxu0 %v81
    %194 = vmatprep.subr.mxu0 0.0
    %195 = vmatpush1.msra.mxu0 %v80
    %196 = vmatprep.subr.mxu0 0.0
    %197 = vmatpush1.msra.mxu0 %v79
    %198 = vmatprep.subr.mxu0 0.0
    %199 = vmatpush1.msra.mxu0 %v78
    %200 = vmatprep.subr.mxu0 0.0
    %201 = vmatpush1.msra.mxu0 %v77
    %202 = vmatprep.subr.mxu0 0.0
    %203 = vmatpush1.msra.mxu0 %v76
    %204 = vmatprep.subr.mxu0 0.0
    %205 = vmatpush1.msra.mxu0 %v75
    %206 = vmatprep.subr.mxu0 0.0
    %207 = vmatpush1.msra.mxu0 %v74
    %208 = vmatprep.subr.mxu0 0.0
    %209 = vmatpush1.msra.mxu0 %v73
    %210 = vmatprep.subr.mxu0 0.0
    %211 = vmatpush1.msra.mxu0 %v72
    %212 = vmatprep.subr.mxu0 0.0
    %213 = vmatpush2.msra.mxu0 %v103
    %214 = vmatprep.subr.mxu0 0.0
    %215 = vmatpush2.msra.mxu0 %v102
    %216 = vmatprep.subr.mxu0 0.0
    %217 = vmatpush2.msra.mxu0 %v101
    %218 = vmatprep.subr.mxu0 0.0
    %219 = vmatpush2.msra.mxu0 %v100
    %220 = vmatprep.subr.mxu0 0.0
    %221 = vmatpush2.msra.mxu0 %v99
    %222 = vmatprep.subr.mxu0 0.0
    %223 = vmatpush2.msra.mxu0 %v98
    %224 = vmatprep.subr.mxu0 0.0
    %225 = vmatpush2.msra.mxu0 %v97
    %226 = vmatprep.subr.mxu0 0.0
    %227 = vmatpush2.msra.mxu0 %v96
    %228 = vmatprep.subr.mxu0 0.0
    %229 = vmatpush2.msra.mxu0 %v95
    %230 = vmatprep.subr.mxu0 0.0
    %231 = vmatpush2.msra.mxu0 %v94
    %232 = vmatprep.subr.mxu0 0.0
    %233 = vmatpush2.msra.mxu0 %v93
    %234 = vmatprep.subr.mxu0 0.0
    %235 = vmatpush2.msra.mxu0 %v92
    %236 = vmatprep.subr.mxu0 0.0
    %237 = vmatpush2.msra.mxu0 %v91
    %238 = vmatprep.subr.mxu0 0.0
    %239 = vmatpush2.msra.mxu0 %v90
    %240 = vmatprep.subr.mxu0 0.0
    %241 = vmatpush2.msra.mxu0 %v89
    %242 = vmatprep.subr.mxu0 0.0
    %243 = vmatpush2.msra.mxu0 %v88
    %244 = vmatprep.mubr.f32.mxu0 %v107
    %245 = vmatmul.mubr.f32.gmra.mxu0 %v39
    %v246 = vpop.f32.mrf.mxu0
    %v247 = vadd.f32 %v177, %v246
    %v248 = vpop.f32.mrf.mxu0
    %249 = vdwg.mxu0
    %250 = vst [vmem:[#allocation7] sm:$0xf] %v247
    // Predicated region
    $region18: #{tpu_custom_call.1} parent=1 // pred_check
      _
    $region19: #{tpu_custom_call.1} parent=1 // pred_check_branch
      %252 = sbr.rel (0) target = $region21
    $region20: #{tpu_custom_call.1} parent=1 // pred_region
      %s254 = ssub.s32 64, 64
      %255 = vsyncadd [#allocation4], %s254
      %s257 = sshll.u32 [#allocation7], 4
      %s258 = int_to_ptr.vmem [resolvable:$true] %s257
      %260 = dma.vmem_to_hbm [thread:$0]  %s258, 64, %s2, [#allocation4]
    $region21: #{tpu_custom_call.1} parent=1 // pred_fallthru
      _
    // Predicated region
    $region22: #{tpu_custom_call.1} parent=1 // pred_check
      _
    $region23: #{tpu_custom_call.1} parent=1 // pred_check_branch
      %262 = sbr.rel (0) target = $region25
    $region24: #{tpu_custom_call.1} parent=1 // pred_region
      %263 = dma.done [#allocation4], 64
    $region25: #{tpu_custom_call.1} parent=1 // pred_fallthru
      _
    %264 = vsyncpa [#allocation3], 1
    %265 = vsyncpa [#allocation6], 1
    %266 = vsyncpa [#allocation4], 1

</llo_original>
